<compile_context>
chip_gen: v7x
topology: tpu7x:2x2x1
jax: 0.10.0
libtpu: 0.0.40
codegen_flags: <defaults>
</compile_context>

<pallas_src>
import functools

import jax
import jax.numpy as jnp
from jax.experimental import pallas as pl
from jax.experimental.pallas import tpu as pltpu


def _round_up(n, m):
    return ((n + m - 1) // m) * m


def _actor_disturb_kernel(phi,
                          s_ref, a_ref,
                          w1s_ref, w1a_ref, b1_ref,
                          w2_ref, b2_ref,
                          w3_ref, b3_ref,
                          o_ref):
    s = s_ref[...]          # [TB, state_dim]  f32
    a = a_ref[...]          # [TB, action_dim] f32 (also used in the f32 tail)

    # Layer 1: h1 = relu(states @ W1_s + actions @ W1_a + b1)
    # (split matmul replaces the concat; bf16 MXU operands, f32 accumulation)
    h1 = jnp.dot(s.astype(jnp.bfloat16), w1s_ref[...],
                 preferred_element_type=jnp.float32)
    h1 = h1 + jnp.dot(a.astype(jnp.bfloat16), w1a_ref[...],
                      preferred_element_type=jnp.float32)
    h1 = jnp.maximum(h1 + b1_ref[...], 0.0)

    # Layer 2: h2 = relu(h1 @ W2 + b2)
    h2 = jnp.dot(h1.astype(jnp.bfloat16), w2_ref[...],
                 preferred_element_type=jnp.float32)
    h2 = jnp.maximum(h2 + b2_ref[...], 0.0)

    # Layer 3: out = tanh(h2 @ W3 + b3)
    out = jnp.dot(h2.astype(jnp.bfloat16), w3_ref[...],
                  preferred_element_type=jnp.float32)
    out = jnp.tanh(out + b3_ref[...])

    # clamp(phi * actor(x) + actions, -1, 1)   (phi baked in as an immediate)
    o_ref[...] = jnp.clip(phi * out + a, -1.0, 1.0).astype(o_ref.dtype)


def init_params(key, state_dim, action_dim, hidden_dim):
    """PyTorch-Linear-style init; weights as [in, out] f32, biases [1, out] f32."""
    dims = [state_dim + action_dim, hidden_dim[0], hidden_dim[1], action_dim]
    params = {}
    for i in range(3):
        key, kw, kb = jax.random.split(key, 3)
        bound = 1.0 / jnp.sqrt(dims[i])
        params[f"w{i+1}"] = jax.random.uniform(
            kw, (dims[i], dims[i + 1]), jnp.float32, -bound, bound)
        params[f"b{i+1}"] = jax.random.uniform(
            kb, (1, dims[i + 1]), jnp.float32, -bound, bound)
    return params


def prepare_params(params, state_dim):
    """One-time prep: split w1, zero-pad hidden dims to lane multiples (128),
    cast matmul weights to bf16 (biases stay f32 for the f32 epilogue)."""
    w1, b1 = params["w1"], params["b1"]
    w2, b2 = params["w2"], params["b2"]
    w3, b3 = params["w3"], params["b3"]
    h1, h2 = w1.shape[1], w2.shape[1]
    h1p, h2p = _round_up(h1, 128), _round_up(h2, 128)

    def pad2(x, rows, cols):
        return jnp.pad(x, ((0, rows - x.shape[0]), (0, cols - x.shape[1])))

    w1_s = w1[:state_dim, :]
    w1_a = w1[state_dim:, :]
    return {
        "w1_s": pad2(w1_s, w1_s.shape[0], h1p).astype(jnp.bfloat16),
        "w1_a": pad2(w1_a, w1_a.shape[0], h1p).astype(jnp.bfloat16),
        "b1":   pad2(b1, 1, h1p).astype(jnp.float32),
        "w2":   pad2(w2, h1p, h2p).astype(jnp.bfloat16),
        "b2":   pad2(b2, 1, h2p).astype(jnp.float32),
        "w3":   pad2(w3, h2p, w3.shape[1]).astype(jnp.bfloat16),
        "b3":   b3.astype(jnp.float32),
    }


def actor_disturb_forward(states, actions, prepped, phi=0.05, block_b=512):
    """Pallas implementation of Actor_disturb.forward.

    states:  [B, state_dim]  f32
    actions: [B, action_dim] f32
    prepped: output of prepare_params()
    """
    B, state_dim = states.shape
    _, action_dim = actions.shape

    # Batch tile: whole batch if small, otherwise a pipelined 512-row tile.
    tb = B if B <= block_b else block_b
    grid = (pl.cdiv(B, tb),)

    def batch_spec(feat):
        return pl.BlockSpec((tb, feat), lambda i: (i, 0))

    def resident_spec(arr):  # weights/biases: constant block -> stay in VMEM
        return pl.BlockSpec(arr.shape, lambda i: (0, 0))

    w_args = (prepped["w1_s"], prepped["w1_a"], prepped["b1"],
              prepped["w2"], prepped["b2"],
              prepped["w3"], prepped["b3"])

    kernel = functools.partial(_actor_disturb_kernel, float(phi))
    return pl.pallas_call(
        kernel,
        out_shape=jax.ShapeDtypeStruct((B, action_dim), jnp.float32),
        grid=grid,
        in_specs=[batch_spec(state_dim), batch_spec(action_dim)]
                 + [resident_spec(w) for w in w_args],
        out_specs=batch_spec(action_dim),
        compiler_params=pltpu.CompilerParams(
            dimension_semantics=("parallel",),          # v7x: shard batch over 2 TCs
            vmem_limit_bytes=32 * 1024 * 1024),          # portable incl. v7x 64MiB VMEM
    )(states, actions, *w_args)


def _reference(states, actions, params, phi):
    x = jnp.concatenate([states, actions], axis=1)
    h1 = jnp.maximum(x @ params["w1"] + params["b1"], 0.0)
    h2 = jnp.maximum(h1 @ params["w2"] + params["b2"], 0.0)
    out = jnp.tanh(h2 @ params["w3"] + params["b3"])
    return jnp.clip(phi * out + actions, -1.0, 1.0)


if __name__ == "__main__":
    state_dim = 16
    action_dim = 8
    hidden_dim = (32, 32)
    phi = 0.05

    key = jax.random.PRNGKey(0)
    key, kp = jax.random.split(key)
    params = init_params(kp, state_dim, action_dim, hidden_dim)
    prepped = prepare_params(params, state_dim)

    # Small-shape check (single tile).
    key, ks, ka = jax.random.split(key, 3)
    states = jax.random.normal(ks, (2, state_dim), jnp.float32)
    actions = jnp.clip(jax.random.normal(ka, (2, action_dim), jnp.float32), -1.0, 1.0)
    out = jax.block_until_ready(actor_disturb_forward(states, actions, prepped, phi=phi))
    ref = _reference(states, actions, params, phi)
    assert out.shape == (2, action_dim)
    assert jnp.allclose(out, ref, atol=5e-3), float(jnp.max(jnp.abs(out - ref)))

    # Larger batch to exercise the pipelined multi-tile grid path.
    key, ks, ka = jax.random.split(key, 3)
    states_l = jax.random.normal(ks, (1024, state_dim), jnp.float32)
    actions_l = jnp.clip(jax.random.normal(ka, (1024, action_dim), jnp.float32), -1.0, 1.0)
    out_l = jax.block_until_ready(
        actor_disturb_forward(states_l, actions_l, prepped, phi=phi))
    ref_l = _reference(states_l, actions_l, params, phi)
    assert out_l.shape == (1024, action_dim)
    assert jnp.allclose(out_l, ref_l, atol=5e-3), float(jnp.max(jnp.abs(out_l - ref_l)))

    print("KERNEL_OK")
</pallas_src>

<mosaic_0001>
module attributes {stable_mosaic.version = 11 : i64} {
  func.func @_actor_disturb_kernel(%arg0: i32, %arg1: memref<2x16xf32, #tpu.memory_space<vmem>>, %arg2: memref<2x8xf32, #tpu.memory_space<vmem>>, %arg3: memref<16x128xbf16, #tpu.memory_space<vmem>>, %arg4: memref<8x128xbf16, #tpu.memory_space<vmem>>, %arg5: memref<1x128xf32, #tpu.memory_space<vmem>>, %arg6: memref<128x128xbf16, #tpu.memory_space<vmem>>, %arg7: memref<1x128xf32, #tpu.memory_space<vmem>>, %arg8: memref<128x8xbf16, #tpu.memory_space<vmem>>, %arg9: memref<1x8xf32, #tpu.memory_space<vmem>>, %arg10: memref<2x8xf32, #tpu.memory_space<vmem>>) attributes {dimension_semantics = [#tpu.dimension_semantics<parallel>], iteration_bounds = array<i64: 1>, scalar_prefetch = 0 : i64, scratch_operands = 0 : i64, tpu.core_type = #tpu.core_type<tc>, window_params = [{transform_indices = @transform_0, window_bounds = array<i64: 2, 16>}, {transform_indices = @transform_1, window_bounds = array<i64: 2, 8>}, {pipeline_mode = #tpu.pipeline_mode<synchronous>, transform_indices = @transform_2, window_bounds = array<i64: 16, 128>}, {pipeline_mode = #tpu.pipeline_mode<synchronous>, transform_indices = @transform_3, window_bounds = array<i64: 8, 128>}, {pipeline_mode = #tpu.pipeline_mode<synchronous>, transform_indices = @transform_4, window_bounds = array<i64: 1, 128>}, {pipeline_mode = #tpu.pipeline_mode<synchronous>, transform_indices = @transform_5, window_bounds = array<i64: 128, 128>}, {pipeline_mode = #tpu.pipeline_mode<synchronous>, transform_indices = @transform_6, window_bounds = array<i64: 1, 128>}, {pipeline_mode = #tpu.pipeline_mode<synchronous>, transform_indices = @transform_7, window_bounds = array<i64: 128, 8>}, {pipeline_mode = #tpu.pipeline_mode<synchronous>, transform_indices = @transform_8, window_bounds = array<i64: 1, 8>}, {transform_indices = @transform_9, window_bounds = array<i64: 2, 8>}]} {
    %c0 = arith.constant 0 : index
    %c0_0 = arith.constant 0 : index
    %0 = vector.load %arg1[%c0, %c0_0] : memref<2x16xf32, #tpu.memory_space<vmem>>, vector<2x16xf32>
    %c0_1 = arith.constant 0 : index
    %c0_2 = arith.constant 0 : index
    %1 = vector.load %arg2[%c0_1, %c0_2] : memref<2x8xf32, #tpu.memory_space<vmem>>, vector<2x8xf32>
    %2 = arith.truncf %0 : vector<2x16xf32> to vector<2x16xbf16>
    %c0_3 = arith.constant 0 : index
    %c0_4 = arith.constant 0 : index
    %3 = vector.load %arg3[%c0_3, %c0_4] : memref<16x128xbf16, #tpu.memory_space<vmem>>, vector<16x128xbf16>
    %cst = arith.constant dense<0.000000e+00> : vector<2x128xf32>
    %4 = tpu.matmul %2, %3, %cst {dimension_numbers = #tpu.dot_dimension_numbers<[1], [0], [0], [1], [0, 0, 1, 1], [], []>} : vector<2x16xbf16>, vector<16x128xbf16>, vector<2x128xf32> -> vector<2x128xf32>
    %5 = arith.truncf %1 : vector<2x8xf32> to vector<2x8xbf16>
    %c0_5 = arith.constant 0 : index
    %c0_6 = arith.constant 0 : index
    %6 = vector.load %arg4[%c0_5, %c0_6] : memref<8x128xbf16, #tpu.memory_space<vmem>>, vector<8x128xbf16>
    %cst_7 = arith.constant dense<0.000000e+00> : vector<2x128xf32>
    %7 = tpu.matmul %5, %6, %cst_7 {dimension_numbers = #tpu.dot_dimension_numbers<[1], [0], [0], [1], [0, 0, 1, 1], [], []>} : vector<2x8xbf16>, vector<8x128xbf16>, vector<2x128xf32> -> vector<2x128xf32>
    %8 = arith.addf %4, %7 : vector<2x128xf32>
    %c0_8 = arith.constant 0 : index
    %c0_9 = arith.constant 0 : index
    %9 = vector.load %arg5[%c0_8, %c0_9] : memref<1x128xf32, #tpu.memory_space<vmem>>, vector<1x128xf32>
    %10 = vector.broadcast %9 : vector<1x128xf32> to vector<2x128xf32>
    %11 = arith.addf %8, %10 : vector<2x128xf32>
    %cst_10 = arith.constant 0.000000e+00 : f32
    %12 = vector.broadcast %cst_10 : f32 to vector<2x128xf32>
    %13 = arith.maximumf %11, %12 : vector<2x128xf32>
    %14 = arith.truncf %13 : vector<2x128xf32> to vector<2x128xbf16>
    %c0_11 = arith.constant 0 : index
    %c0_12 = arith.constant 0 : index
    %15 = vector.load %arg6[%c0_11, %c0_12] : memref<128x128xbf16, #tpu.memory_space<vmem>>, vector<128x128xbf16>
    %cst_13 = arith.constant dense<0.000000e+00> : vector<2x128xf32>
    %16 = tpu.matmul %14, %15, %cst_13 {dimension_numbers = #tpu.dot_dimension_numbers<[1], [0], [0], [1], [0, 0, 1, 1], [], []>} : vector<2x128xbf16>, vector<128x128xbf16>, vector<2x128xf32> -> vector<2x128xf32>
    %c0_14 = arith.constant 0 : index
    %c0_15 = arith.constant 0 : index
    %17 = vector.load %arg7[%c0_14, %c0_15] : memref<1x128xf32, #tpu.memory_space<vmem>>, vector<1x128xf32>
    %18 = vector.broadcast %17 : vector<1x128xf32> to vector<2x128xf32>
    %19 = arith.addf %16, %18 : vector<2x128xf32>
    %cst_16 = arith.constant 0.000000e+00 : f32
    %20 = vector.broadcast %cst_16 : f32 to vector<2x128xf32>
    %21 = arith.maximumf %19, %20 : vector<2x128xf32>
    %22 = arith.truncf %21 : vector<2x128xf32> to vector<2x128xbf16>
    %c0_17 = arith.constant 0 : index
    %c0_18 = arith.constant 0 : index
    %23 = vector.load %arg8[%c0_17, %c0_18] : memref<128x8xbf16, #tpu.memory_space<vmem>>, vector<128x8xbf16>
    %cst_19 = arith.constant dense<0.000000e+00> : vector<2x8xf32>
    %24 = tpu.matmul %22, %23, %cst_19 {dimension_numbers = #tpu.dot_dimension_numbers<[1], [0], [0], [1], [0, 0, 1, 1], [], []>} : vector<2x128xbf16>, vector<128x8xbf16>, vector<2x8xf32> -> vector<2x8xf32>
    %c0_20 = arith.constant 0 : index
    %c0_21 = arith.constant 0 : index
    %25 = vector.load %arg9[%c0_20, %c0_21] : memref<1x8xf32, #tpu.memory_space<vmem>>, vector<1x8xf32>
    %26 = vector.broadcast %25 : vector<1x8xf32> to vector<2x8xf32>
    %27 = arith.addf %24, %26 : vector<2x8xf32>
    %28 = math.tanh %27 : vector<2x8xf32>
    %cst_22 = arith.constant 5.000000e-02 : f32
    %29 = vector.broadcast %cst_22 : f32 to vector<2x8xf32>
    %30 = arith.mulf %29, %28 : vector<2x8xf32>
    %31 = arith.addf %30, %1 : vector<2x8xf32>
    %cst_23 = arith.constant -1.000000e+00 : f32
    %cst_24 = arith.constant 1.000000e+00 : f32
    %32 = vector.broadcast %cst_23 : f32 to vector<2x8xf32>
    %33 = arith.maximumf %32, %31 : vector<2x8xf32>
    %34 = vector.broadcast %cst_24 : f32 to vector<2x8xf32>
    %35 = arith.minimumf %34, %33 : vector<2x8xf32>
    %c0_25 = arith.constant 0 : index
    %c0_26 = arith.constant 0 : index
    %36 = vector.load %arg10[%c0_25, %c0_26] : memref<2x8xf32, #tpu.memory_space<vmem>>, vector<2x8xf32>
    tpu.vector_store %arg10[%c0_25, %c0_26], %35 {strides = array<i32>} : memref<2x8xf32, #tpu.memory_space<vmem>>, vector<2x8xf32>,
    return
  }
  func.func @transform_0(%arg0: i32) -> (i32, i32) {
    %c0_i32 = arith.constant 0 : i32
    %c0_i32_0 = arith.constant 0 : i32
    return %arg0, %c0_i32 : i32, i32
  }
  func.func @transform_1(%arg0: i32) -> (i32, i32) {
    %c0_i32 = arith.constant 0 : i32
    %c0_i32_0 = arith.constant 0 : i32
    return %arg0, %c0_i32 : i32, i32
  }
  func.func @transform_2(%arg0: i32) -> (i32, i32) {
    %c0_i32 = arith.constant 0 : i32
    %c0_i32_0 = arith.constant 0 : i32
    %c0_i32_1 = arith.constant 0 : i32
    return %c0_i32, %c0_i32_0 : i32, i32
  }
  func.func @transform_3(%arg0: i32) -> (i32, i32) {
    %c0_i32 = arith.constant 0 : i32
    %c0_i32_0 = arith.constant 0 : i32
    %c0_i32_1 = arith.constant 0 : i32
    return %c0_i32, %c0_i32_0 : i32, i32
  }
  func.func @transform_4(%arg0: i32) -> (i32, i32) {
    %c0_i32 = arith.constant 0 : i32
    %c0_i32_0 = arith.constant 0 : i32
    %c0_i32_1 = arith.constant 0 : i32
    return %c0_i32, %c0_i32_0 : i32, i32
  }
  func.func @transform_5(%arg0: i32) -> (i32, i32) {
    %c0_i32 = arith.constant 0 : i32
    %c0_i32_0 = arith.constant 0 : i32
    %c0_i32_1 = arith.constant 0 : i32
    return %c0_i32, %c0_i32_0 : i32, i32
  }
  func.func @transform_6(%arg0: i32) -> (i32, i32) {
    %c0_i32 = arith.constant 0 : i32
    %c0_i32_0 = arith.constant 0 : i32
    %c0_i32_1 = arith.constant 0 : i32
    return %c0_i32, %c0_i32_0 : i32, i32
  }
  func.func @transform_7(%arg0: i32) -> (i32, i32) {
    %c0_i32 = arith.constant 0 : i32
    %c0_i32_0 = arith.constant 0 : i32
    %c0_i32_1 = arith.constant 0 : i32
    return %c0_i32, %c0_i32_0 : i32, i32
  }
  func.func @transform_8(%arg0: i32) -> (i32, i32) {
    %c0_i32 = arith.constant 0 : i32
    %c0_i32_0 = arith.constant 0 : i32
    %c0_i32_1 = arith.constant 0 : i32
    return %c0_i32, %c0_i32_0 : i32, i32
  }
  func.func @transform_9(%arg0: i32) -> (i32, i32) {
    %c0_i32 = arith.constant 0 : i32
    %c0_i32_0 = arith.constant 0 : i32
    return %arg0, %c0_i32 : i32, i32
  }
}

</mosaic_0001>

<llo_original>
// kernel: tpu_custom_call.1
$region0: #{tpu_custom_call.1}
  #allocation0 [shape = 'u32[]', space=smem, size = 0x4, offset = 0x4, fixed_abs, tag = 'smem constant byte address 0x4 - core index']
  #allocation1 [shape = 'u32[144,128]{1,0:T(1,128)}', space=vmem, size = 0x12000, scoped, tag = 'internal scratch']
  %s0 = inlined_call_operand.vmem [shape: f32[2,16], index: 0, kind: input, shape index: {}]
  %s1 = inlined_call_operand.vmem [shape: f32[2,8], index: 1, kind: input, shape index: {}]
  %s2 = inlined_call_operand.vmem [shape: bf16[16,128], index: 2, kind: input, shape index: {}]
  %s3 = inlined_call_operand.vmem [shape: bf16[8,128], index: 3, kind: input, shape index: {}]
  %s4 = inlined_call_operand.vmem [shape: f32[1,128], index: 4, kind: input, shape index: {}]
  %s5 = inlined_call_operand.vmem [shape: bf16[128,128], index: 5, kind: input, shape index: {}]
  %s6 = inlined_call_operand.vmem [shape: f32[1,128], index: 6, kind: input, shape index: {}]
  %s7 = inlined_call_operand.vmem [shape: bf16[128,8], index: 7, kind: input, shape index: {}]
  %s8 = inlined_call_operand.vmem [shape: f32[1,8], index: 8, kind: input, shape index: {}]
  %s9 = inlined_call_operand.hbm [shape: f32[2,8], index: 9, kind: output, shape index: {}]
  %s10 = sld [smem:[#allocation0]]
  $region46: #{tpu_custom_call.1} parent=0
    _
  %s12 = ssub.s32 1, %s10
  %s13 = scalar_select 0, %s12, %s10
  $region1: #{tpu_custom_call.1} parent=0
    #allocation2 [shape = 'u8[1024]{0}', space=vmem, size = 0x400, scoped, tag = 'output window, operand 0, single buffered']
    #allocation3 [shape = 's32[1]{0}', space=sflag, size = 0x4, scoped, tag = 'scoped memory for tpu_custom_call.1']
    %14 = vsyncpa [#allocation3], 0
    // Predicated region
    $region2: #{tpu_custom_call.1} parent=1 // pred_check
      _
    $region3: #{tpu_custom_call.1} parent=1 // pred_check_branch
      %16 = sbr.rel (0) target = $region5
    $region4: #{tpu_custom_call.1} parent=1 // pred_region
      _
    $region5: #{tpu_custom_call.1} parent=1 // pred_fallthru
      _
    // Predicated region
    $region6: #{tpu_custom_call.1} parent=1 // pred_check
      _
    $region7: #{tpu_custom_call.1} parent=1 // pred_check_branch
      %18 = sbr.rel (0) target = $region9
    $region8: #{tpu_custom_call.1} parent=1 // pred_region
      _
    $region9: #{tpu_custom_call.1} parent=1 // pred_fallthru
      _
    // Predicated region
    $region10: #{tpu_custom_call.1} parent=1 // pred_check
      _
    $region11: #{tpu_custom_call.1} parent=1 // pred_check_branch
      %20 = sbr.rel (0) target = $region13
    $region12: #{tpu_custom_call.1} parent=1 // pred_region
      _
    $region13: #{tpu_custom_call.1} parent=1 // pred_fallthru
      _
    // Predicated region
    $region14: #{tpu_custom_call.1} parent=1 // pred_check
      _
    $region15: #{tpu_custom_call.1} parent=1 // pred_check_branch
      %22 = sbr.rel (0) target = $region17
    $region16: #{tpu_custom_call.1} parent=1 // pred_region
      _
    $region17: #{tpu_custom_call.1} parent=1 // pred_fallthru
      _
    // Predicated region
    $region18: #{tpu_custom_call.1} parent=1 // pred_check
      _
    $region19: #{tpu_custom_call.1} parent=1 // pred_check_branch
      %24 = sbr.rel (0) target = $region21
    $region20: #{tpu_custom_call.1} parent=1 // pred_region
      _
    $region21: #{tpu_custom_call.1} parent=1 // pred_fallthru
      _
    // Predicated region
    $region22: #{tpu_custom_call.1} parent=1 // pred_check
      _
    $region23: #{tpu_custom_call.1} parent=1 // pred_check_branch
      %26 = sbr.rel (0) target = $region25
    $region24: #{tpu_custom_call.1} parent=1 // pred_region
      _
    $region25: #{tpu_custom_call.1} parent=1 // pred_fallthru
      _
    // Predicated region
    $region26: #{tpu_custom_call.1} parent=1 // pred_check
      _
    $region27: #{tpu_custom_call.1} parent=1 // pred_check_branch
      %28 = sbr.rel (0) target = $region29
    $region28: #{tpu_custom_call.1} parent=1 // pred_region
      _
    $region29: #{tpu_custom_call.1} parent=1 // pred_fallthru
      _
    // Predicated region
    $region30: #{tpu_custom_call.1} parent=1 // pred_check
      _
    $region31: #{tpu_custom_call.1} parent=1 // pred_check_branch
      %30 = sbr.rel (0) target = $region33
    $region32: #{tpu_custom_call.1} parent=1 // pred_region
      _
    $region33: #{tpu_custom_call.1} parent=1 // pred_fallthru
      _
    // Predicated region
    $region34: #{tpu_custom_call.1} parent=1 // pred_check
      _
    $region35: #{tpu_custom_call.1} parent=1 // pred_check_branch
      %32 = sbr.rel (0) target = $region37
    $region36: #{tpu_custom_call.1} parent=1 // pred_region
      _
    $region37: #{tpu_custom_call.1} parent=1 // pred_fallthru
      _
    %v34 = vld [vmem:[%s0] sm:$0x3]
    %v35 = vld [vmem:[%s1] sm:$0x3]
    %v36 = vpack.c.bf16 %v34, %v34
    %v37 = vld [vmem:[%s2] sm:$0xf]
    %v38 = vld [vmem:[%s2 + $0x4] sm:$0xf]
    %v39 = vpack.c.bf16 %v35, %v35
    %v40 = vld [vmem:[%s3] sm:$0xf]
    %vm41 = vcmask 64512
    %v43 = vsel %vm41, %v39, 0
    %vm45 = vcmask 1043456
    %v47 = vsel %vm45, %v40, 0
    %49 = vmatprep.subr.bf16.mxu0 0
    %50 = vmatpush1.bf16.msra.mxu0 %v47
    %51 = vmatprep.subr.bf16.mxu0 0
    %52 = vmatpush1.bf16.msra.mxu0 0
    %53 = vmatprep.subr.bf16.mxu0 0
    %54 = vmatpush1.bf16.msra.mxu0 0
    %55 = vmatprep.subr.bf16.mxu0 0
    %56 = vmatpush1.bf16.msra.mxu0 0
    %57 = vmatprep.subr.bf16.mxu0 0
    %58 = vmatpush1.bf16.msra.mxu0 0
    %59 = vmatprep.subr.bf16.mxu0 0
    %60 = vmatpush1.bf16.msra.mxu0 0
    %61 = vmatprep.subr.bf16.mxu0 0
    %62 = vmatpush1.bf16.msra.mxu0 0
    %63 = vmatprep.subr.bf16.mxu0 0
    %64 = vmatpush1.bf16.msra.mxu0 0
    %65 = vmatprep.subr.bf16.mxu0 0
    %66 = vmatpush1.bf16.msra.mxu0 0
    %67 = vmatprep.subr.bf16.mxu0 0
    %68 = vmatpush1.bf16.msra.mxu0 0
    %69 = vmatprep.subr.bf16.mxu0 0
    %70 = vmatpush1.bf16.msra.mxu0 0
    %71 = vmatprep.subr.bf16.mxu0 0
    %72 = vmatpush1.bf16.msra.mxu0 0
    %73 = vmatprep.subr.bf16.mxu0 0
    %74 = vmatpush1.bf16.msra.mxu0 0
    %75 = vmatprep.subr.bf16.mxu0 0
    %76 = vmatpush1.bf16.msra.mxu0 0
    %77 = vmatprep.subr.bf16.mxu0 0
    %78 = vmatpush1.bf16.msra.mxu0 0
    %79 = vmatprep.subr.bf16.mxu0 0
    %80 = vmatpush1.bf16.msra.mxu0 0
    %81 = vmatprep.mubr.bf16.mxu0 0
    %82 = vmatmul.mubr.bf16.gmra.mrb[0].mxu0 %v43
    %v83 = vpop.f32.mrb[0].mxu0
    %v84 = vadd.f32 0.0, %v83
    %v85 = vpop.f32.mrb[0].mxu0
    %v86 = vpop.f32.mrb[0].mxu0
    %v87 = vpop.f32.mrb[0].mxu0
    %88 = vdwg.mxu0
    %v91 = vunpack.c.l.b16 %v37
    %v92 = vunpack.c.l.b16 %v38
    %v93 = vpack.c.b16 %v92, %v91
    %vm95 = vcmask 130048
    %v97 = vsel %vm95, %v36, 0
    %99 = vmatprep.subr.bf16.mxu0 0
    %100 = vmatpush1.bf16.msra.mxu0 %v93
    %101 = vmatprep.subr.bf16.mxu0 0
    %102 = vmatpush1.bf16.msra.mxu0 0
    %103 = vmatprep.subr.bf16.mxu0 0
    %104 = vmatpush1.bf16.msra.mxu0 0
    %105 = vmatprep.subr.bf16.mxu0 0
    %106 = vmatpush1.bf16.msra.mxu0 0
    %107 = vmatprep.subr.bf16.mxu0 0
    %108 = vmatpush1.bf16.msra.mxu0 0
    %109 = vmatprep.subr.bf16.mxu0 0
    %110 = vmatpush1.bf16.msra.mxu0 0
    %111 = vmatprep.subr.bf16.mxu0 0
    %112 = vmatpush1.bf16.msra.mxu0 0
    %113 = vmatprep.subr.bf16.mxu0 0
    %114 = vmatpush1.bf16.msra.mxu0 0
    %115 = vmatprep.subr.bf16.mxu0 0
    %116 = vmatpush1.bf16.msra.mxu0 0
    %117 = vmatprep.subr.bf16.mxu0 0
    %118 = vmatpush1.bf16.msra.mxu0 0
    %119 = vmatprep.subr.bf16.mxu0 0
    %120 = vmatpush1.bf16.msra.mxu0 0
    %121 = vmatprep.subr.bf16.mxu0 0
    %122 = vmatpush1.bf16.msra.mxu0 0
    %123 = vmatprep.subr.bf16.mxu0 0
    %124 = vmatpush1.bf16.msra.mxu0 0
    %125 = vmatprep.subr.bf16.mxu0 0
    %126 = vmatpush1.bf16.msra.mxu0 0
    %127 = vmatprep.subr.bf16.mxu0 0
    %128 = vmatpush1.bf16.msra.mxu0 0
    %129 = vmatprep.subr.bf16.mxu0 0
    %130 = vmatpush1.bf16.msra.mxu0 0
    %131 = vmatprep.mubr.bf16.mxu0 0
    %132 = vmatmul.mubr.bf16.gmra.mrb[0].mxu0 %v97
    %v133 = vpop.f32.mrb[0].mxu0
    %v134 = vadd.f32 %v84, %v133
    %v135 = vpop.f32.mrb[0].mxu0
    %v136 = vpop.f32.mrb[0].mxu0
    %v137 = vpop.f32.mrb[0].mxu0
    %138 = vdwg.mxu0
    %v139 = vld [vmem:[%s4] sm:$0x1]
    %v141 = vlaneseq
    %v142 = vshrl.u32 %v141, 7
    %v143 = vsub.s32 0, %v142
    %v144 = vrot.slane %v139, %v143
    %v146 = vadd.f32 %v134, %v144
    %v147 = vmax.f32 %v146, 0.0
    %v148 = vpack.c.bf16 %v147, %v147
    %v149 = vld [vmem:[%s5] sm:$0xf]
    %v150 = vld [vmem:[%s5 + $0x4] sm:$0xf]
    %v151 = vld [vmem:[%s5 + $0x8] sm:$0xf]
    %v152 = vld [vmem:[%s5 + $0xc] sm:$0xf]
    %v153 = vld [vmem:[%s5 + $0x10] sm:$0xf]
    %v154 = vld [vmem:[%s5 + $0x14] sm:$0xf]
    %v155 = vld [vmem:[%s5 + $0x18] sm:$0xf]
    %v156 = vld [vmem:[%s5 + $0x1c] sm:$0xf]
    %v157 = vld [vmem:[%s5 + $0x20] sm:$0xf]
    %v158 = vld [vmem:[%s5 + $0x24] sm:$0xf]
    %v159 = vld [vmem:[%s5 + $0x28] sm:$0xf]
    %v160 = vld [vmem:[%s5 + $0x2c] sm:$0xf]
    %v161 = vld [vmem:[%s5 + $0x30] sm:$0xf]
    %v162 = vld [vmem:[%s5 + $0x34] sm:$0xf]
    %v163 = vld [vmem:[%s5 + $0x38] sm:$0xf]
    %v164 = vld [vmem:[%s5 + $0x3c] sm:$0xf]
    %v165 = vld [vmem:[%s6] sm:$0x1]
    %v167 = vlaneseq
    %v168 = vshrl.u32 %v167, 7
    %v169 = vsub.s32 0, %v168
    %v170 = vrot.slane %v165, %v169
    %v188 = vunpack.c.l.b16 %v149
    %v189 = vunpack.c.l.b16 %v150
    %v190 = vunpack.c.l.b16 %v151
    %v191 = vunpack.c.l.b16 %v152
    %v192 = vunpack.c.l.b16 %v153
    %v193 = vunpack.c.l.b16 %v154
    %v194 = vunpack.c.l.b16 %v155
    %v195 = vunpack.c.l.b16 %v156
    %v196 = vunpack.c.l.b16 %v157
    %v197 = vunpack.c.l.b16 %v158
    %v198 = vunpack.c.l.b16 %v159
    %v199 = vunpack.c.l.b16 %v160
    %v200 = vunpack.c.l.b16 %v161
    %v201 = vunpack.c.l.b16 %v162
    %v202 = vunpack.c.l.b16 %v163
    %v203 = vunpack.c.l.b16 %v164
    %v204 = vpack.c.b16 %v189, %v188
    %v205 = vpack.c.b16 %v191, %v190
    %v206 = vpack.c.b16 %v193, %v192
    %v207 = vpack.c.b16 %v195, %v194
    %v208 = vpack.c.b16 %v197, %v196
    %v209 = vpack.c.b16 %v199, %v198
    %v210 = vpack.c.b16 %v201, %v200
    %v211 = vpack.c.b16 %v203, %v202
    %220 = vmatprep.subr.bf16.mxu0 0
    %221 = vmatpush1.bf16.msra.mxu0 %v204
    %222 = vmatprep.subr.bf16.mxu0 0
    %223 = vmatpush1.bf16.msra.mxu0 %v205
    %224 = vmatprep.subr.bf16.mxu0 0
    %225 = vmatpush1.bf16.msra.mxu0 %v206
    %226 = vmatprep.subr.bf16.mxu0 0
    %227 = vmatpush1.bf16.msra.mxu0 %v207
    %228 = vmatprep.subr.bf16.mxu0 0
    %229 = vmatpush1.bf16.msra.mxu0 %v208
    %230 = vmatprep.subr.bf16.mxu0 0
    %231 = vmatpush1.bf16.msra.mxu0 %v209
    %232 = vmatprep.subr.bf16.mxu0 0
    %233 = vmatpush1.bf16.msra.mxu0 %v210
    %234 = vmatprep.subr.bf16.mxu0 0
    %235 = vmatpush1.bf16.msra.mxu0 %v211
    %236 = vmatprep.subr.bf16.mxu0 0
    %237 = vmatpush1.bf16.msra.mxu0 0
    %238 = vmatprep.subr.bf16.mxu0 0
    %239 = vmatpush1.bf16.msra.mxu0 0
    %240 = vmatprep.subr.bf16.mxu0 0
    %241 = vmatpush1.bf16.msra.mxu0 0
    %242 = vmatprep.subr.bf16.mxu0 0
    %243 = vmatpush1.bf16.msra.mxu0 0
    %244 = vmatprep.subr.bf16.mxu0 0
    %245 = vmatpush1.bf16.msra.mxu0 0
    %246 = vmatprep.subr.bf16.mxu0 0
    %247 = vmatpush1.bf16.msra.mxu0 0
    %248 = vmatprep.subr.bf16.mxu0 0
    %249 = vmatpush1.bf16.msra.mxu0 0
    %250 = vmatprep.subr.bf16.mxu0 0
    %251 = vmatpush1.bf16.msra.mxu0 0
    %252 = vmatprep.mubr.bf16.mxu0 0
    %253 = vmatmul.mubr.bf16.gmra.mrb[0].mxu0 %v148
    %v254 = vpop.f32.mrb[0].mxu0
    %v255 = vadd.f32 %v170, %v254
    %v256 = vpop.f32.mrb[0].mxu0
    %v257 = vpop.f32.mrb[0].mxu0
    %v258 = vpop.f32.mrb[0].mxu0
    %259 = vdwg.mxu0
    %v260 = vmax.f32 %v255, 0.0
    %v261 = vpack.c.bf16 %v260, %v260
    %v262 = vld [vmem:[%s7] sm:$0xf]
    %v263 = vld [vmem:[%s7 + $0x4] sm:$0xf]
    %v264 = vld [vmem:[%s7 + $0x8] sm:$0xf]
    %v265 = vld [vmem:[%s7 + $0xc] sm:$0xf]
    %v266 = vld [vmem:[%s7 + $0x10] sm:$0xf]
    %v267 = vld [vmem:[%s7 + $0x14] sm:$0xf]
    %v268 = vld [vmem:[%s7 + $0x18] sm:$0xf]
    %v269 = vld [vmem:[%s7 + $0x1c] sm:$0xf]
    %v270 = vld [vmem:[%s7 + $0x20] sm:$0xf]
    %v271 = vld [vmem:[%s7 + $0x24] sm:$0xf]
    %v272 = vld [vmem:[%s7 + $0x28] sm:$0xf]
    %v273 = vld [vmem:[%s7 + $0x2c] sm:$0xf]
    %v274 = vld [vmem:[%s7 + $0x30] sm:$0xf]
    %v275 = vld [vmem:[%s7 + $0x34] sm:$0xf]
    %v276 = vld [vmem:[%s7 + $0x38] sm:$0xf]
    %v277 = vld [vmem:[%s7 + $0x3c] sm:$0xf]
    %v278 = vld [vmem:[%s8] sm:$0x1]
    %v280 = vlaneseq
    %v281 = vshrl.u32 %v280, 7
    %v282 = vsub.s32 0, %v281
    %v283 = vrot.slane %v278, %v282
    %v301 = vunpack.c.l.b16 %v262
    %v302 = vunpack.c.l.b16 %v263
    %v303 = vunpack.c.l.b16 %v264
    %v304 = vunpack.c.l.b16 %v265
    %v305 = vunpack.c.l.b16 %v266
    %v306 = vunpack.c.l.b16 %v267
    %v307 = vunpack.c.l.b16 %v268
    %v308 = vunpack.c.l.b16 %v269
    %v309 = vunpack.c.l.b16 %v270
    %v310 = vunpack.c.l.b16 %v271
    %v311 = vunpack.c.l.b16 %v272
    %v312 = vunpack.c.l.b16 %v273
    %v313 = vunpack.c.l.b16 %v274
    %v314 = vunpack.c.l.b16 %v275
    %v315 = vunpack.c.l.b16 %v276
    %v316 = vunpack.c.l.b16 %v277
    %v317 = vpack.c.b16 %v302, %v301
    %v318 = vpack.c.b16 %v304, %v303
    %v319 = vpack.c.b16 %v306, %v305
    %v320 = vpack.c.b16 %v308, %v307
    %v321 = vpack.c.b16 %v310, %v309
    %v322 = vpack.c.b16 %v312, %v311
    %v323 = vpack.c.b16 %v314, %v313
    %v324 = vpack.c.b16 %v316, %v315
    %333 = vmatprep.subr.bf16.mxu0 0
    %334 = vmatpush1.bf16.msra.mxu0 %v317
    %335 = vmatprep.subr.bf16.mxu0 0
    %336 = vmatpush1.bf16.msra.mxu0 %v318
    %337 = vmatprep.subr.bf16.mxu0 0
    %338 = vmatpush1.bf16.msra.mxu0 %v319
    %339 = vmatprep.subr.bf16.mxu0 0
    %340 = vmatpush1.bf16.msra.mxu0 %v320
    %341 = vmatprep.subr.bf16.mxu0 0
    %342 = vmatpush1.bf16.msra.mxu0 %v321
    %343 = vmatprep.subr.bf16.mxu0 0
    %344 = vmatpush1.bf16.msra.mxu0 %v322
    %345 = vmatprep.subr.bf16.mxu0 0
    %346 = vmatpush1.bf16.msra.mxu0 %v323
    %347 = vmatprep.subr.bf16.mxu0 0
    %348 = vmatpush1.bf16.msra.mxu0 %v324
    %349 = vmatprep.subr.bf16.mxu0 0
    %350 = vmatpush1.bf16.msra.mxu0 0
    %351 = vmatprep.subr.bf16.mxu0 0
    %352 = vmatpush1.bf16.msra.mxu0 0
    %353 = vmatprep.subr.bf16.mxu0 0
    %354 = vmatpush1.bf16.msra.mxu0 0
    %355 = vmatprep.subr.bf16.mxu0 0
    %356 = vmatpush1.bf16.msra.mxu0 0
    %357 = vmatprep.subr.bf16.mxu0 0
    %358 = vmatpush1.bf16.msra.mxu0 0
    %359 = vmatprep.subr.bf16.mxu0 0
    %360 = vmatpush1.bf16.msra.mxu0 0
    %361 = vmatprep.subr.bf16.mxu0 0
    %362 = vmatpush1.bf16.msra.mxu0 0
    %363 = vmatprep.subr.bf16.mxu0 0
    %364 = vmatpush1.bf16.msra.mxu0 0
    %365 = vmatprep.mubr.bf16.mxu0 0
    %366 = vmatmul.mubr.bf16.gmra.mrb[0].mxu0 %v261
    %v367 = vpop.f32.mrb[0].mxu0
    %v368 = vadd.f32 %v283, %v367
    %v369 = vpop.f32.mrb[0].mxu0
    %v370 = vpop.f32.mrb[0].mxu0
    %v371 = vpop.f32.mrb[0].mxu0
    %372 = vdwg.mxu0
    %v373 = vtanh.pop %v368
    %v374 = vmul.f32 %v373, 0.05
    %v375 = vadd.f32 %v374, %v35
    %v376 = vmax.f32 %v375, -1.0
    %v377 = vmin.f32 %v376, 1.0
    %vm378 = vcmask 58368
    %379 = vst.msk [vmem:[#allocation2] sm:$0x3] %vm378, %v377
    // Predicated region
    $region38: #{tpu_custom_call.1} parent=1 // pred_check
      _
    $region39: #{tpu_custom_call.1} parent=1 // pred_check_branch
      %381 = sbr.rel (0) target = $region41
    $region40: #{tpu_custom_call.1} parent=1 // pred_region
      %s383 = ssub.s32 32, 32
      %384 = vsyncadd [#allocation3], %s383
      %s386 = sshll.u32 [#allocation2], 4
      %s387 = int_to_ptr.vmem [resolvable:$true] %s386
      %389 = dma.vmem_to_hbm [thread:$0]  %s387, 32, %s9, [#allocation3]
    $region41: #{tpu_custom_call.1} parent=1 // pred_fallthru
      _
    // Predicated region
    $region42: #{tpu_custom_call.1} parent=1 // pred_check
      _
    $region43: #{tpu_custom_call.1} parent=1 // pred_check_branch
      %391 = sbr.rel (0) target = $region45
    $region44: #{tpu_custom_call.1} parent=1 // pred_region
      %392 = dma.done [#allocation3], 32
    $region45: #{tpu_custom_call.1} parent=1 // pred_fallthru
      _
    %393 = vsyncpa [#allocation3], 1

</llo_original>
